<compile_context>
chip_gen: v6e
topology: v6e:2x2x1
jax: 0.10.0
libtpu: 0.0.40
codegen_flags: <defaults>
</compile_context>

<pallas_src>
import functools

import jax
import jax.numpy as jnp
from jax.experimental import pallas as pl
from jax.experimental.pallas import tpu as pltpu

HIDDEN = 500  # fixed by the module definition (nn.Linear(input_size, 500))

# Keep w1 fully VMEM-resident only while it is comfortably small; above this
# the K-tiled path streams w1 slabs (relevant for v7x's 64 MiB per-TC VMEM).
_W1_RESIDENT_BYTES = 16 * 1024 * 1024
_VMEM_BUDGET = 56 * 1024 * 1024


def _round_up(x, m):
    return ((x + m - 1) // m) * m


def _mlp_kernel(x_ref, w1_ref, b1_ref, w2_ref, b2_ref, out_ref, acc_ref, *,
                d_total, k_tile):
    """One (batch-tile, K-slab) step of relu(x @ w1 + b1) @ w2 + b2."""
    k = pl.program_id(1)

    x = x_ref[...]
    if d_total % k_tile != 0:
        # Only the ragged last K slab has out-of-bounds columns; zero them so
        # they contribute nothing (w1's K padding rows are already zero).
        col = jax.lax.broadcasted_iota(jnp.int32, x.shape, 1) + k * k_tile
        x = jnp.where(col < d_total, x, 0)

    # fc1 partial product on the MXU with f32 accumulation; the cast to the
    # compute dtype (bf16 on the perf path) happens here, in-kernel.
    s = jnp.dot(x.astype(w1_ref.dtype), w1_ref[...],
                preferred_element_type=jnp.float32)

    @pl.when(k == 0)
    def _():
        acc_ref[...] = s

    @pl.when(k > 0)
    def _():
        acc_ref[...] += s

    @pl.when(k == pl.num_programs(1) - 1)
    def _():
        # bias + ReLU in f32 on the VPU, fc2 on the MXU (f32 accumulation).
        h = jnp.maximum(acc_ref[...] + b1_ref[...], 0.0)
        o = jnp.dot(h.astype(w2_ref.dtype), w2_ref[...],
                    preferred_element_type=jnp.float32)
        out_ref[...] = (o + b2_ref[...]).astype(out_ref.dtype)


def prepare_params(w1, b1, w2, b2, *, compute_dtype=jnp.bfloat16, k_tile=None):
    """Pad/cast the weights once (hoisted out of the per-forward path).

    w1: (D, H), b1: (H,) or (1, H), w2: (H, C), b2: (C,) or (1, C).
    Returns a dict consumed by `neural_net_forward`.
    """
    cdt = jnp.dtype(compute_dtype)
    D, H = w1.shape
    C = w2.shape[1]
    H_pad = _round_up(H, 128)
    C_pad = _round_up(C, 128)

    if k_tile is None:
        # Resident w1 for small D; stream 2048-wide K slabs for large D.
        k_tile = D if D * H_pad * cdt.itemsize <= _W1_RESIDENT_BYTES else 2048
    if k_tile >= D:
        k_tile = D
    else:
        k_tile = _round_up(k_tile, 128)
    D_k = _round_up(D, k_tile)

    # Zero-fill all padding: padded rows/cols contribute nothing and padded
    # output lanes are sliced off in the wrapper, so the math is exact.
    w1_p = jnp.pad(w1.astype(cdt), ((0, D_k - D), (0, H_pad - H)))
    b1_p = jnp.pad(b1.astype(jnp.float32).reshape(1, H),
                   ((0, 0), (0, H_pad - H)))
    w2_p = jnp.pad(w2.astype(cdt), ((0, H_pad - H), (0, C_pad - C)))
    b2_p = jnp.pad(b2.astype(jnp.float32).reshape(1, C),
                   ((0, 0), (0, C_pad - C)))

    return dict(w1=w1_p, b1=b1_p, w2=w2_p, b2=b2_p,
                in_features=D, hidden=H, num_classes=C,
                k_tile=k_tile, compute_dtype=cdt)


def neural_net_forward(x, params, *, tile_m=2048, out_dtype=None):
    """x: (B, ...) -> flattened to (B, D). Returns (B, num_classes)."""
    w1_p, b1_p = params["w1"], params["b1"]
    w2_p, b2_p = params["w2"], params["b2"]
    D = params["in_features"]
    C = params["num_classes"]
    tk = params["k_tile"]
    cdt = params["compute_dtype"]

    B = x.shape[0]
    x2d = x.reshape(B, -1)
    assert x2d.shape[1] == D, (x2d.shape, D)

    D_k, H_pad = w1_p.shape
    C_pad = w2_p.shape[1]
    grid_k = D_k // tk

    # bf16 path writes bf16 logits (half-width lane-padded writeback); the f32
    # path stays f32 so it is exact vs. the unpadded math.
    kernel_out_dt = jnp.float32 if cdt == jnp.dtype(jnp.float32) else cdt

    # Batch tile: at least 2 grid steps whenever B allows (so the "parallel"
    # axis shards across v7x's two TensorCores), otherwise as large as tile_m
    # to amortize per-step overhead on v6e/v5e.
    tm = min(max(8, _round_up(tile_m, 8)),
             max(8, _round_up(pl.cdiv(B, 2), 8)))

    x_it = x2d.dtype.itemsize
    w_it = w1_p.dtype.itemsize
    o_it = jnp.dtype(kernel_out_dt).itemsize

    def vmem_needed(tm_):
        # Pallas double-buffers every input/output spec; scratch is single.
        return (2 * (tm_ * tk * x_it           # x tile
                     + tk * H_pad * w_it       # w1 slab
                     + H_pad * 4 + C_pad * 4   # biases (f32)
                     + H_pad * C_pad * w_it    # w2
                     + tm_ * C_pad * o_it)     # out tile
                + tm_ * H_pad * 4)             # f32 accumulator scratch

    while tm > 8 and vmem_needed(tm) > _VMEM_BUDGET:
        tm = max(8, _round_up(tm // 2, 8))
    grid_m = pl.cdiv(B, tm)

    vmem_limit = int(min(64 * 1024 * 1024,
                         vmem_needed(tm) * 1.3 + (1 << 20)))

    flops = 2 * B * (D * H_pad + H_pad * C_pad)
    bytes_accessed = (x2d.size * x_it + w1_p.size * w_it + w2_p.size * w_it
                      + b1_p.size * 4 + b2_p.size * 4 + B * C_pad * o_it)

    kernel = functools.partial(_mlp_kernel, d_total=D, k_tile=tk)

    out_p = pl.pallas_call(
        kernel,
        out_shape=jax.ShapeDtypeStruct((B, C_pad), kernel_out_dt),
        grid_spec=pltpu.PrefetchScalarGridSpec(
            num_scalar_prefetch=0,
            grid=(grid_m, grid_k),
            in_specs=[
                pl.BlockSpec((tm, tk), lambda i, k: (i, k)),        # x streams
                pl.BlockSpec((tk, H_pad), lambda i, k: (k, 0)),     # w1 K-slabs
                pl.BlockSpec((1, H_pad), lambda i, k: (0, 0)),      # b1 resident
                pl.BlockSpec((H_pad, C_pad), lambda i, k: (0, 0)),  # w2 resident
                pl.BlockSpec((1, C_pad), lambda i, k: (0, 0)),      # b2 resident
            ],
            out_specs=pl.BlockSpec((tm, C_pad), lambda i, k: (i, 0)),
            scratch_shapes=[pltpu.VMEM((tm, H_pad), jnp.float32)],
        ),
        compiler_params=pltpu.CompilerParams(
            dimension_semantics=("parallel", "arbitrary"),
            vmem_limit_bytes=vmem_limit,
        ),
        cost_estimate=pl.CostEstimate(
            flops=flops, transcendentals=0, bytes_accessed=bytes_accessed),
    )(x2d, w1_p, b1_p, w2_p, b2_p)

    out = out_p[:, :C]                    # drop padded output lanes
    if out_dtype is not None:
        out = out.astype(out_dtype)
    return out


def init_params(key, input_size, num_classes):
    """Deterministic init mirroring nn.Linear's U(-1/sqrt(fan_in), 1/sqrt(fan_in))."""
    k1, k2, k3, k4 = jax.random.split(key, 4)
    bound1 = 1.0 / (input_size ** 0.5)
    bound2 = 1.0 / (HIDDEN ** 0.5)
    w1 = jax.random.uniform(k1, (input_size, HIDDEN), jnp.float32, -bound1, bound1)
    b1 = jax.random.uniform(k2, (1, HIDDEN), jnp.float32, -bound1, bound1)
    w2 = jax.random.uniform(k3, (HIDDEN, num_classes), jnp.float32, -bound2, bound2)
    b2 = jax.random.uniform(k4, (1, num_classes), jnp.float32, -bound2, bound2)
    return w1, b1, w2, b2


if __name__ == "__main__":
    key = jax.random.PRNGKey(0)
    k_in, k_params, k_in2, k_params2 = jax.random.split(key, 4)

    batch = 8
    input_size = 256   # e.g. a flattened 16x16 single-channel image
    num_classes = 10

    x = jax.random.normal(k_in, (batch, input_size), jnp.float32)
    w1, b1, w2, b2 = init_params(k_params, input_size, num_classes)

    # Plain-JAX f32 reference (matches the PyTorch module's forward).
    ref = jnp.maximum(x @ w1 + b1, 0.0) @ w2 + b2

    # f32 path: tight check that the padded/tiled layout is exact.
    p_f32 = prepare_params(w1, b1, w2, b2, compute_dtype=jnp.float32)
    out_f32 = jax.block_until_ready(neural_net_forward(x, p_f32))
    assert out_f32.shape == (batch, num_classes)
    assert jnp.allclose(out_f32, ref, atol=1e-4, rtol=1e-4)

    # bf16 path (default perf configuration on v5e/v6e/v7x): bf16 operands +
    # bf16 logits with f32 accumulation -> looser tolerance.
    p_bf16 = prepare_params(w1, b1, w2, b2)
    out_bf16 = jax.block_until_ready(neural_net_forward(x, p_bf16))
    assert out_bf16.shape == (batch, num_classes)
    assert jnp.allclose(out_bf16.astype(jnp.float32), ref, atol=3e-2, rtol=3e-2)

    # Force the large-D K-tiled path at a small size (streamed w1 slabs + f32
    # accumulator + ragged last K slab masked in-kernel); f32 for exactness.
    rag_d = 200                       # not a multiple of the 128-wide K slab
    x_r = jax.random.normal(k_in2, (batch, rag_d), jnp.float32)
    w1r, b1r, w2r, b2r = init_params(k_params2, rag_d, num_classes)
    ref_r = jnp.maximum(x_r @ w1r + b1r, 0.0) @ w2r + b2r
    p_kt = prepare_params(w1r, b1r, w2r, b2r, compute_dtype=jnp.float32,
                          k_tile=128)
    out_kt = jax.block_until_ready(neural_net_forward(x_r, p_kt))
    assert out_kt.shape == (batch, num_classes)
    assert jnp.allclose(out_kt, ref_r, atol=1e-4, rtol=1e-4)

    print("KERNEL_OK")
</pallas_src>

<mosaic_0001>
module attributes {stable_mosaic.version = 11 : i64} {
  func.func @_mlp_kernel(%arg0: i32, %arg1: i32, %arg2: memref<8x256xf32, #tpu.memory_space<vmem>>, %arg3: memref<256x512xf32, #tpu.memory_space<vmem>>, %arg4: memref<1x512xf32, #tpu.memory_space<vmem>>, %arg5: memref<512x128xf32, #tpu.memory_space<vmem>>, %arg6: memref<1x128xf32, #tpu.memory_space<vmem>>, %arg7: memref<8x128xf32, #tpu.memory_space<vmem>>, %arg8: memref<8x512xf32, #tpu.memory_space<vmem>>) attributes {dimension_semantics = [#tpu.dimension_semantics<parallel>, #tpu.dimension_semantics<arbitrary>], iteration_bounds = array<i64: 1, 1>, scalar_prefetch = 0 : i64, scratch_operands = 1 : i64, tpu.core_type = #tpu.core_type<tc>, window_params = [{transform_indices = @transform_0, window_bounds = array<i64: 8, 256>}, {transform_indices = @transform_1, window_bounds = array<i64: 256, 512>}, {pipeline_mode = #tpu.pipeline_mode<synchronous>, transform_indices = @transform_2, window_bounds = array<i64: 1, 512>}, {pipeline_mode = #tpu.pipeline_mode<synchronous>, transform_indices = @transform_3, window_bounds = array<i64: 512, 128>}, {pipeline_mode = #tpu.pipeline_mode<synchronous>, transform_indices = @transform_4, window_bounds = array<i64: 1, 128>}, {transform_indices = @transform_5, window_bounds = array<i64: 8, 128>}]} {
    %c0 = arith.constant 0 : index
    %c0_0 = arith.constant 0 : index
    %0 = vector.load %arg2[%c0, %c0_0] : memref<8x256xf32, #tpu.memory_space<vmem>>, vector<8x256xf32>
    %c0_1 = arith.constant 0 : index
    %c0_2 = arith.constant 0 : index
    %1 = vector.load %arg3[%c0_1, %c0_2] : memref<256x512xf32, #tpu.memory_space<vmem>>, vector<256x512xf32>
    %cst = arith.constant dense<0.000000e+00> : vector<8x512xf32>
    %2 = tpu.matmul %0, %1, %cst {dimension_numbers = #tpu.dot_dimension_numbers<[1], [0], [0], [1], [0, 0, 1, 1], [], []>} : vector<8x256xf32>, vector<256x512xf32>, vector<8x512xf32> -> vector<8x512xf32>
    %c0_i32 = arith.constant 0 : i32
    %3 = arith.cmpi eq, %arg1, %c0_i32 : i32
    %4 = arith.extui %3 : i1 to i32
    %c0_i32_3 = arith.constant 0 : i32
    %5 = arith.cmpi ne, %4, %c0_i32_3 : i32
    scf.if %5 {
      %c0_8 = arith.constant 0 : index
      %c0_9 = arith.constant 0 : index
      %12 = vector.load %arg8[%c0_8, %c0_9] : memref<8x512xf32, #tpu.memory_space<vmem>>, vector<8x512xf32>
      tpu.vector_store %arg8[%c0_8, %c0_9], %2 {strides = array<i32>} : memref<8x512xf32, #tpu.memory_space<vmem>>, vector<8x512xf32>,
    } else {
    }
    %c0_i32_4 = arith.constant 0 : i32
    %6 = arith.cmpi sgt, %arg1, %c0_i32_4 : i32
    %7 = arith.extui %6 : i1 to i32
    %c0_i32_5 = arith.constant 0 : i32
    %8 = arith.cmpi ne, %7, %c0_i32_5 : i32
    scf.if %8 {
      %c0_8 = arith.constant 0 : index
      %c0_9 = arith.constant 0 : index
      %12 = vector.load %arg8[%c0_8, %c0_9] : memref<8x512xf32, #tpu.memory_space<vmem>>, vector<8x512xf32>
      %13 = arith.addf %12, %2 : vector<8x512xf32>
      %c0_10 = arith.constant 0 : index
      %c0_11 = arith.constant 0 : index
      %14 = vector.load %arg8[%c0_10, %c0_11] : memref<8x512xf32, #tpu.memory_space<vmem>>, vector<8x512xf32>
      tpu.vector_store %arg8[%c0_10, %c0_11], %13 {strides = array<i32>} : memref<8x512xf32, #tpu.memory_space<vmem>>, vector<8x512xf32>,
    } else {
    }
    %c0_i32_6 = arith.constant 0 : i32
    %9 = arith.cmpi eq, %arg1, %c0_i32_6 : i32
    %10 = arith.extui %9 : i1 to i32
    %c0_i32_7 = arith.constant 0 : i32
    %11 = arith.cmpi ne, %10, %c0_i32_7 : i32
    scf.if %11 {
      %c0_8 = arith.constant 0 : index
      %c0_9 = arith.constant 0 : index
      %12 = vector.load %arg8[%c0_8, %c0_9] : memref<8x512xf32, #tpu.memory_space<vmem>>, vector<8x512xf32>
      %c0_10 = arith.constant 0 : index
      %c0_11 = arith.constant 0 : index
      %13 = vector.load %arg4[%c0_10, %c0_11] : memref<1x512xf32, #tpu.memory_space<vmem>>, vector<1x512xf32>
      %14 = vector.broadcast %13 : vector<1x512xf32> to vector<8x512xf32>
      %15 = arith.addf %12, %14 : vector<8x512xf32>
      %cst_12 = arith.constant 0.000000e+00 : f32
      %16 = vector.broadcast %cst_12 : f32 to vector<8x512xf32>
      %17 = arith.maximumf %15, %16 : vector<8x512xf32>
      %c0_13 = arith.constant 0 : index
      %c0_14 = arith.constant 0 : index
      %18 = vector.load %arg5[%c0_13, %c0_14] : memref<512x128xf32, #tpu.memory_space<vmem>>, vector<512x128xf32>
      %cst_15 = arith.constant dense<0.000000e+00> : vector<8x128xf32>
      %19 = tpu.matmul %17, %18, %cst_15 {dimension_numbers = #tpu.dot_dimension_numbers<[1], [0], [0], [1], [0, 0, 1, 1], [], []>} : vector<8x512xf32>, vector<512x128xf32>, vector<8x128xf32> -> vector<8x128xf32>
      %c0_16 = arith.constant 0 : index
      %c0_17 = arith.constant 0 : index
      %20 = vector.load %arg6[%c0_16, %c0_17] : memref<1x128xf32, #tpu.memory_space<vmem>>, vector<1x128xf32>
      %21 = vector.broadcast %20 : vector<1x128xf32> to vector<8x128xf32>
      %22 = arith.addf %19, %21 : vector<8x128xf32>
      %c0_18 = arith.constant 0 : index
      %c0_19 = arith.constant 0 : index
      %23 = vector.load %arg7[%c0_18, %c0_19] : memref<8x128xf32, #tpu.memory_space<vmem>>, vector<8x128xf32>
      tpu.vector_store %arg7[%c0_18, %c0_19], %22 {strides = array<i32>} : memref<8x128xf32, #tpu.memory_space<vmem>>, vector<8x128xf32>,
    } else {
    }
    return
  }
  func.func @transform_0(%arg0: i32, %arg1: i32) -> (i32, i32) {
    %c0_i32 = arith.constant 0 : i32
    return %arg0, %arg1 : i32, i32
  }
  func.func @transform_1(%arg0: i32, %arg1: i32) -> (i32, i32) {
    %c0_i32 = arith.constant 0 : i32
    %c0_i32_0 = arith.constant 0 : i32
    return %arg1, %c0_i32 : i32, i32
  }
  func.func @transform_2(%arg0: i32, %arg1: i32) -> (i32, i32) {
    %c0_i32 = arith.constant 0 : i32
    %c0_i32_0 = arith.constant 0 : i32
    %c0_i32_1 = arith.constant 0 : i32
    return %c0_i32, %c0_i32_0 : i32, i32
  }
  func.func @transform_3(%arg0: i32, %arg1: i32) -> (i32, i32) {
    %c0_i32 = arith.constant 0 : i32
    %c0_i32_0 = arith.constant 0 : i32
    %c0_i32_1 = arith.constant 0 : i32
    return %c0_i32, %c0_i32_0 : i32, i32
  }
  func.func @transform_4(%arg0: i32, %arg1: i32) -> (i32, i32) {
    %c0_i32 = arith.constant 0 : i32
    %c0_i32_0 = arith.constant 0 : i32
    %c0_i32_1 = arith.constant 0 : i32
    return %c0_i32, %c0_i32_0 : i32, i32
  }
  func.func @transform_5(%arg0: i32, %arg1: i32) -> (i32, i32) {
    %c0_i32 = arith.constant 0 : i32
    %c0_i32_0 = arith.constant 0 : i32
    return %arg0, %c0_i32 : i32, i32
  }
}

</mosaic_0001>

<llo_original>
// kernel: tpu_custom_call.1
$region0: #{tpu_custom_call.1}
  #allocation0 [shape = 'u32[]', space=smem, size = 0x4, offset = 0x4, fixed_abs, tag = 'smem constant byte address 0x4 - core index']
  #allocation1 [shape = 'u32[144,128]{1,0:T(1,128)}', space=vmem, size = 0x12000, scoped, tag = 'internal scratch']
  #allocation2 [shape = 'f32[8,512]{1,0:T(8,128)}', space=vmem, size = 0x4000, scoped, tag = 'scratch operand']
  %s0 = inlined_call_operand.hbm [shape: f32[8,256], index: 0, kind: input, shape index: {}]
  %s1 = inlined_call_operand.hbm [shape: f32[256,512], index: 1, kind: input, shape index: {}]
  %s2 = inlined_call_operand.hbm [shape: f32[1,512], index: 2, kind: input, shape index: {}]
  %s3 = inlined_call_operand.hbm [shape: f32[512,128], index: 3, kind: input, shape index: {}]
  %s4 = inlined_call_operand.vmem [shape: f32[1,128], index: 4, kind: input, shape index: {}]
  %s5 = inlined_call_operand.hbm [shape: f32[8,128], index: 5, kind: output, shape index: {}]
  %s6 = sld [smem:[#allocation0]]
  $region58: #{tpu_custom_call.1} parent=0
    _
  %s8 = ssub.s32 1, %s6
  %s9 = scalar_select 0, %s8, %s6
  $region1: #{tpu_custom_call.1} parent=0
    #allocation3 [shape = 'u8[8192]{0}', space=vmem, size = 0x2000, scoped, tag = 'input window, operand 0, single buffered']
    #allocation4 [shape = 's32[1]{0}', space=sflag, size = 0x4, scoped, tag = 'scoped memory for tpu_custom_call.1']
    #allocation5 [shape = 's32[1]{0}', space=sflag, size = 0x4, scoped, tag = 'scoped memory for tpu_custom_call.1']
    #allocation6 [shape = 'u8[524288]{0}', space=vmem, size = 0x80000, scoped, tag = 'input window, operand 1, single buffered']
    #allocation7 [shape = 's32[1]{0}', space=sflag, size = 0x4, scoped, tag = 'scoped memory for tpu_custom_call.1']
    #allocation8 [shape = 'u8[2048]{0}', space=vmem, size = 0x800, scoped, tag = 'input window, operand 2, single buffered']
    #allocation9 [shape = 'u8[262144]{0}', space=vmem, size = 0x40000, scoped, tag = 'input window, operand 3, single buffered']
    #allocation10 [shape = 's32[1]{0}', space=sflag, size = 0x4, scoped, tag = 'scoped memory for tpu_custom_call.1']
    #allocation11 [shape = 'u8[4096]{0}', space=vmem, size = 0x1000, scoped, tag = 'output window, operand 0, single buffered']
    %10 = vsyncpa [#allocation4], 0
    %11 = vsyncpa [#allocation7], 0
    %12 = vsyncpa [#allocation10], 0
    %13 = vsyncpa [#allocation5], 0
    // Predicated region
    $region2: #{tpu_custom_call.1} parent=1 // pred_check
      _
    $region3: #{tpu_custom_call.1} parent=1 // pred_check_branch
      %15 = sbr.rel (0) target = $region5
    $region4: #{tpu_custom_call.1} parent=1 // pred_region
      %s17 = ssub.s32 256, 256
      %18 = vsyncadd [#allocation4], %s17
      %s20 = sshll.u32 [#allocation3], 4
      %s21 = int_to_ptr.vmem [resolvable:$true] %s20
      %23 = dma.hbm_to_vmem [thread:$0]  %s0, 256, %s21, [#allocation4]
    $region5: #{tpu_custom_call.1} parent=1 // pred_fallthru
      _
    // Predicated region
    $region6: #{tpu_custom_call.1} parent=1 // pred_check
      _
    $region7: #{tpu_custom_call.1} parent=1 // pred_check_branch
      %25 = sbr.rel (0) target = $region9
    $region8: #{tpu_custom_call.1} parent=1 // pred_region
      %s27 = ssub.s32 16384, 16384
      %28 = vsyncadd [#allocation7], %s27
      %s29 = sshll.u32 [#allocation6], 4
      %s30 = int_to_ptr.vmem [resolvable:$true] %s29
      %35 = dma.hbm_to_vmem [thread:$0]  %s1, 16384, %s30, [#allocation7], 512, 512, 32
    $region9: #{tpu_custom_call.1} parent=1 // pred_fallthru
      _
    // Predicated region
    $region10: #{tpu_custom_call.1} parent=1 // pred_check
      _
    $region11: #{tpu_custom_call.1} parent=1 // pred_check_branch
      %37 = sbr.rel (0) target = $region13
    $region12: #{tpu_custom_call.1} parent=1 // pred_region
      %s39 = ssub.s32 64, 64
      %40 = vsyncadd [#allocation7], %s39
      %s42 = sshll.u32 [#allocation8], 4
      %s43 = int_to_ptr.vmem [resolvable:$true] %s42
      %45 = dma.hbm_to_vmem [thread:$0]  %s2, 64, %s43, [#allocation7]
    $region13: #{tpu_custom_call.1} parent=1 // pred_fallthru
      _
    // Predicated region
    $region14: #{tpu_custom_call.1} parent=1 // pred_check
      _
    $region15: #{tpu_custom_call.1} parent=1 // pred_check_branch
      %47 = sbr.rel (0) target = $region17
    $region16: #{tpu_custom_call.1} parent=1 // pred_region
      %s49 = ssub.s32 8192, 8192
      %50 = vsyncadd [#allocation10], %s49
      %s51 = sshll.u32 [#allocation9], 4
      %s52 = int_to_ptr.vmem [resolvable:$true] %s51
      %57 = dma.hbm_to_vmem [thread:$0]  %s3, 8192, %s52, [#allocation10], 128, 128, 8
    $region17: #{tpu_custom_call.1} parent=1 // pred_fallthru
      _
    // Predicated region
    $region18: #{tpu_custom_call.1} parent=1 // pred_check
      _
    $region19: #{tpu_custom_call.1} parent=1 // pred_check_branch
      %59 = sbr.rel (0) target = $region21
    $region20: #{tpu_custom_call.1} parent=1 // pred_region
      _
    $region21: #{tpu_custom_call.1} parent=1 // pred_fallthru
      _
    // Predicated region
    $region22: #{tpu_custom_call.1} parent=1 // pred_check
      _
    $region23: #{tpu_custom_call.1} parent=1 // pred_check_branch
      %61 = sbr.rel (0) target = $region25
    $region24: #{tpu_custom_call.1} parent=1 // pred_region
      %62 = dma.done [#allocation4], 256
    $region25: #{tpu_custom_call.1} parent=1 // pred_fallthru
      _
    // Predicated region
    $region26: #{tpu_custom_call.1} parent=1 // pred_check
      _
    $region27: #{tpu_custom_call.1} parent=1 // pred_check_branch
      %64 = sbr.rel (0) target = $region29
    $region28: #{tpu_custom_call.1} parent=1 // pred_region
      %65 = dma.done [#allocation7], 16384
    $region29: #{tpu_custom_call.1} parent=1 // pred_fallthru
      _
    // Predicated region
    $region30: #{tpu_custom_call.1} parent=1 // pred_check
      _
    $region31: #{tpu_custom_call.1} parent=1 // pred_check_branch
      %67 = sbr.rel (0) target = $region33
    $region32: #{tpu_custom_call.1} parent=1 // pred_region
      %68 = dma.done [#allocation7], 64
    $region33: #{tpu_custom_call.1} parent=1 // pred_fallthru
      _
    // Predicated region
    $region34: #{tpu_custom_call.1} parent=1 // pred_check
      _
    $region35: #{tpu_custom_call.1} parent=1 // pred_check_branch
      %70 = sbr.rel (0) target = $region37
    $region36: #{tpu_custom_call.1} parent=1 // pred_region
      %71 = dma.done [#allocation10], 8192
    $region37: #{tpu_custom_call.1} parent=1 // pred_fallthru
      _
    %v72 = vld [vmem:[#allocation3] sm:$0xff]
    %v73 = vld [vmem:[#allocation3 + $0x8] sm:$0xff]
    %v74 = vld [vmem:[#allocation6] sm:$0xff]
    %v75 = vld [vmem:[#allocation6 + $0x8] sm:$0xff]
    %v76 = vld [vmem:[#allocation6 + $0x10] sm:$0xff]
    %v77 = vld [vmem:[#allocation6 + $0x18] sm:$0xff]
    %v78 = vld [vmem:[#allocation6 + $0x20] sm:$0xff]
    %v79 = vld [vmem:[#allocation6 + $0x28] sm:$0xff]
    %v80 = vld [vmem:[#allocation6 + $0x30] sm:$0xff]
    %v81 = vld [vmem:[#allocation6 + $0x38] sm:$0xff]
    %v82 = vld [vmem:[#allocation6 + $0x40] sm:$0xff]
    %v83 = vld [vmem:[#allocation6 + $0x48] sm:$0xff]
    %v84 = vld [vmem:[#allocation6 + $0x50] sm:$0xff]
    %v85 = vld [vmem:[#allocation6 + $0x58] sm:$0xff]
    %v86 = vld [vmem:[#allocation6 + $0x60] sm:$0xff]
    %v87 = vld [vmem:[#allocation6 + $0x68] sm:$0xff]
    %v88 = vld [vmem:[#allocation6 + $0x70] sm:$0xff]
    %v89 = vld [vmem:[#allocation6 + $0x78] sm:$0xff]
    %v90 = vld [vmem:[#allocation6 + $0x80] sm:$0xff]
    %v91 = vld [vmem:[#allocation6 + $0x88] sm:$0xff]
    %v92 = vld [vmem:[#allocation6 + $0x90] sm:$0xff]
    %v93 = vld [vmem:[#allocation6 + $0x98] sm:$0xff]
    %v94 = vld [vmem:[#allocation6 + $0xa0] sm:$0xff]
    %v95 = vld [vmem:[#allocation6 + $0xa8] sm:$0xff]
    %v96 = vld [vmem:[#allocation6 + $0xb0] sm:$0xff]
    %v97 = vld [vmem:[#allocation6 + $0xb8] sm:$0xff]
    %v98 = vld [vmem:[#allocation6 + $0xc0] sm:$0xff]
    %v99 = vld [vmem:[#allocation6 + $0xc8] sm:$0xff]
    %v100 = vld [vmem:[#allocation6 + $0xd0] sm:$0xff]
    %v101 = vld [vmem:[#allocation6 + $0xd8] sm:$0xff]
    %v102 = vld [vmem:[#allocation6 + $0xe0] sm:$0xff]
    %v103 = vld [vmem:[#allocation6 + $0xe8] sm:$0xff]
    %v104 = vld [vmem:[#allocation6 + $0xf0] sm:$0xff]
    %v105 = vld [vmem:[#allocation6 + $0xf8] sm:$0xff]
    %v106 = vld [vmem:[#allocation6 + $0x100] sm:$0xff]
    %v107 = vld [vmem:[#allocation6 + $0x108] sm:$0xff]
    %v108 = vld [vmem:[#allocation6 + $0x110] sm:$0xff]
    %v109 = vld [vmem:[#allocation6 + $0x118] sm:$0xff]
    %v110 = vld [vmem:[#allocation6 + $0x120] sm:$0xff]
    %v111 = vld [vmem:[#allocation6 + $0x128] sm:$0xff]
    %v112 = vld [vmem:[#allocation6 + $0x130] sm:$0xff]
    %v113 = vld [vmem:[#allocation6 + $0x138] sm:$0xff]
    %v114 = vld [vmem:[#allocation6 + $0x140] sm:$0xff]
    %v115 = vld [vmem:[#allocation6 + $0x148] sm:$0xff]
    %v116 = vld [vmem:[#allocation6 + $0x150] sm:$0xff]
    %v117 = vld [vmem:[#allocation6 + $0x158] sm:$0xff]
    %v118 = vld [vmem:[#allocation6 + $0x160] sm:$0xff]
    %v119 = vld [vmem:[#allocation6 + $0x168] sm:$0xff]
    %v120 = vld [vmem:[#allocation6 + $0x170] sm:$0xff]
    %v121 = vld [vmem:[#allocation6 + $0x178] sm:$0xff]
    %v122 = vld [vmem:[#allocation6 + $0x180] sm:$0xff]
    %v123 = vld [vmem:[#allocation6 + $0x188] sm:$0xff]
    %v124 = vld [vmem:[#allocation6 + $0x190] sm:$0xff]
    %v125 = vld [vmem:[#allocation6 + $0x198] sm:$0xff]
    %v126 = vld [vmem:[#allocation6 + $0x1a0] sm:$0xff]
    %v127 = vld [vmem:[#allocation6 + $0x1a8] sm:$0xff]
    %v128 = vld [vmem:[#allocation6 + $0x1b0] sm:$0xff]
    %v129 = vld [vmem:[#allocation6 + $0x1b8] sm:$0xff]
    %v130 = vld [vmem:[#allocation6 + $0x1c0] sm:$0xff]
    %v131 = vld [vmem:[#allocation6 + $0x1c8] sm:$0xff]
    %v132 = vld [vmem:[#allocation6 + $0x1d0] sm:$0xff]
    %v133 = vld [vmem:[#allocation6 + $0x1d8] sm:$0xff]
    %v134 = vld [vmem:[#allocation6 + $0x1e0] sm:$0xff]
    %v135 = vld [vmem:[#allocation6 + $0x1e8] sm:$0xff]
    %v136 = vld [vmem:[#allocation6 + $0x1f0] sm:$0xff]
    %v137 = vld [vmem:[#allocation6 + $0x1f8] sm:$0xff]
    %v138 = vld [vmem:[#allocation6 + $0x200] sm:$0xff]
    %v139 = vld [vmem:[#allocation6 + $0x208] sm:$0xff]
    %v140 = vld [vmem:[#allocation6 + $0x210] sm:$0xff]
    %v141 = vld [vmem:[#allocation6 + $0x218] sm:$0xff]
    %v142 = vld [vmem:[#allocation6 + $0x220] sm:$0xff]
    %v143 = vld [vmem:[#allocation6 + $0x228] sm:$0xff]
    %v144 = vld [vmem:[#allocation6 + $0x230] sm:$0xff]
    %v145 = vld [vmem:[#allocation6 + $0x238] sm:$0xff]
    %v146 = vld [vmem:[#allocation6 + $0x240] sm:$0xff]
    %v147 = vld [vmem:[#allocation6 + $0x248] sm:$0xff]
    %v148 = vld [vmem:[#allocation6 + $0x250] sm:$0xff]
    %v149 = vld [vmem:[#allocation6 + $0x258] sm:$0xff]
    %v150 = vld [vmem:[#allocation6 + $0x260] sm:$0xff]
    %v151 = vld [vmem:[#allocation6 + $0x268] sm:$0xff]
    %v152 = vld [vmem:[#allocation6 + $0x270] sm:$0xff]
    %v153 = vld [vmem:[#allocation6 + $0x278] sm:$0xff]
    %v154 = vld [vmem:[#allocation6 + $0x280] sm:$0xff]
    %v155 = vld [vmem:[#allocation6 + $0x288] sm:$0xff]
    %v156 = vld [vmem:[#allocation6 + $0x290] sm:$0xff]
    %v157 = vld [vmem:[#allocation6 + $0x298] sm:$0xff]
    %v158 = vld [vmem:[#allocation6 + $0x2a0] sm:$0xff]
    %v159 = vld [vmem:[#allocation6 + $0x2a8] sm:$0xff]
    %v160 = vld [vmem:[#allocation6 + $0x2b0] sm:$0xff]
    %v161 = vld [vmem:[#allocation6 + $0x2b8] sm:$0xff]
    %v162 = vld [vmem:[#allocation6 + $0x2c0] sm:$0xff]
    %v163 = vld [vmem:[#allocation6 + $0x2c8] sm:$0xff]
    %v164 = vld [vmem:[#allocation6 + $0x2d0] sm:$0xff]
    %v165 = vld [vmem:[#allocation6 + $0x2d8] sm:$0xff]
    %v166 = vld [vmem:[#allocation6 + $0x2e0] sm:$0xff]
    %v167 = vld [vmem:[#allocation6 + $0x2e8] sm:$0xff]
    %v168 = vld [vmem:[#allocation6 + $0x2f0] sm:$0xff]
    %v169 = vld [vmem:[#allocation6 + $0x2f8] sm:$0xff]
    %v170 = vld [vmem:[#allocation6 + $0x300] sm:$0xff]
    %v171 = vld [vmem:[#allocation6 + $0x308] sm:$0xff]
    %v172 = vld [vmem:[#allocation6 + $0x310] sm:$0xff]
    %v173 = vld [vmem:[#allocation6 + $0x318] sm:$0xff]
    %v174 = vld [vmem:[#allocation6 + $0x320] sm:$0xff]
    %v175 = vld [vmem:[#allocation6 + $0x328] sm:$0xff]
    %v176 = vld [vmem:[#allocation6 + $0x330] sm:$0xff]
    %v177 = vld [vmem:[#allocation6 + $0x338] sm:$0xff]
    %v178 = vld [vmem:[#allocation6 + $0x340] sm:$0xff]
    %v179 = vld [vmem:[#allocation6 + $0x348] sm:$0xff]
    %v180 = vld [vmem:[#allocation6 + $0x350] sm:$0xff]
    %v181 = vld [vmem:[#allocation6 + $0x358] sm:$0xff]
    %v182 = vld [vmem:[#allocation6 + $0x360] sm:$0xff]
    %v183 = vld [vmem:[#allocation6 + $0x368] sm:$0xff]
    %v184 = vld [vmem:[#allocation6 + $0x370] sm:$0xff]
    %v185 = vld [vmem:[#allocation6 + $0x378] sm:$0xff]
    %v186 = vld [vmem:[#allocation6 + $0x380] sm:$0xff]
    %v187 = vld [vmem:[#allocation6 + $0x388] sm:$0xff]
    %v188 = vld [vmem:[#allocation6 + $0x390] sm:$0xff]
    %v189 = vld [vmem:[#allocation6 + $0x398] sm:$0xff]
    %v190 = vld [vmem:[#allocation6 + $0x3a0] sm:$0xff]
    %v191 = vld [vmem:[#allocation6 + $0x3a8] sm:$0xff]
    %v192 = vld [vmem:[#allocation6 + $0x3b0] sm:$0xff]
    %v193 = vld [vmem:[#allocation6 + $0x3b8] sm:$0xff]
    %v194 = vld [vmem:[#allocation6 + $0x3c0] sm:$0xff]
    %v195 = vld [vmem:[#allocation6 + $0x3c8] sm:$0xff]
    %v196 = vld [vmem:[#allocation6 + $0x3d0] sm:$0xff]
    %v197 = vld [vmem:[#allocation6 + $0x3d8] sm:$0xff]
    %v198 = vld [vmem:[#allocation6 + $0x3e0] sm:$0xff]
    %v199 = vld [vmem:[#allocation6 + $0x3e8] sm:$0xff]
    %v200 = vld [vmem:[#allocation6 + $0x3f0] sm:$0xff]
    %v201 = vld [vmem:[#allocation6 + $0x3f8] sm:$0xff]
    %202 = vmatprep.subr.mxu0 %v135
    %203 = vmatpush1.msra.mxu0 %v134
    %204 = vmatprep.subr.mxu0 %v131
    %205 = vmatpush1.msra.mxu0 %v130
    %206 = vmatprep.subr.mxu0 %v127
    %207 = vmatpush1.msra.mxu0 %v126
    %208 = vmatprep.subr.mxu0 %v123
    %209 = vmatpush1.msra.mxu0 %v122
    %210 = vmatprep.subr.mxu0 %v119
    %211 = vmatpush1.msra.mxu0 %v118
    %212 = vmatprep.subr.mxu0 %v115
    %213 = vmatpush1.msra.mxu0 %v114
    %214 = vmatprep.subr.mxu0 %v111
    %215 = vmatpush1.msra.mxu0 %v110
    %216 = vmatprep.subr.mxu0 %v107
    %217 = vmatpush1.msra.mxu0 %v106
    %218 = vmatprep.subr.mxu0 %v103
    %219 = vmatpush1.msra.mxu0 %v102
    %220 = vmatprep.subr.mxu0 %v99
    %221 = vmatpush1.msra.mxu0 %v98
    %222 = vmatprep.subr.mxu0 %v95
    %223 = vmatpush1.msra.mxu0 %v94
    %224 = vmatprep.subr.mxu0 %v91
    %225 = vmatpush1.msra.mxu0 %v90
    %226 = vmatprep.subr.mxu0 %v87
    %227 = vmatpush1.msra.mxu0 %v86
    %228 = vmatprep.subr.mxu0 %v83
    %229 = vmatpush1.msra.mxu0 %v82
    %230 = vmatprep.subr.mxu0 %v79
    %231 = vmatpush1.msra.mxu0 %v78
    %232 = vmatprep.subr.mxu0 %v75
    %233 = vmatpush1.msra.mxu0 %v74
    %234 = vmatprep.subr.mxu0 %v199
    %235 = vmatpush2.msra.mxu0 %v198
    %236 = vmatprep.subr.mxu0 %v195
    %237 = vmatpush2.msra.mxu0 %v194
    %238 = vmatprep.subr.mxu0 %v191
    %239 = vmatpush2.msra.mxu0 %v190
    %240 = vmatprep.subr.mxu0 %v187
    %241 = vmatpush2.msra.mxu0 %v186
    %242 = vmatprep.subr.mxu0 %v183
    %243 = vmatpush2.msra.mxu0 %v182
    %244 = vmatprep.subr.mxu0 %v179
    %245 = vmatpush2.msra.mxu0 %v178
    %246 = vmatprep.subr.mxu0 %v175
    %247 = vmatpush2.msra.mxu0 %v174
    %248 = vmatprep.subr.mxu0 %v171
    %249 = vmatpush2.msra.mxu0 %v170
    %250 = vmatprep.subr.mxu0 %v167
    %251 = vmatpush2.msra.mxu0 %v166
    %252 = vmatprep.subr.mxu0 %v163
    %253 = vmatpush2.msra.mxu0 %v162
    %254 = vmatprep.subr.mxu0 %v159
    %255 = vmatpush2.msra.mxu0 %v158
    %256 = vmatprep.subr.mxu0 %v155
    %257 = vmatpush2.msra.mxu0 %v154
    %258 = vmatprep.subr.mxu0 %v151
    %259 = vmatpush2.msra.mxu0 %v150
    %260 = vmatprep.subr.mxu0 %v147
    %261 = vmatpush2.msra.mxu0 %v146
    %262 = vmatprep.subr.mxu0 %v143
    %263 = vmatpush2.msra.mxu0 %v142
    %264 = vmatprep.subr.mxu0 %v139
    %265 = vmatpush2.msra.mxu0 %v138
    %266 = vmatprep.mubr.f32.mxu0 %v73
    %267 = vmatmul.mubr.f32.gmra.mxu0 %v72
    %v268 = vpop.f32.mrf.mxu0
    %v269 = vadd.f32 0.0, %v268
    %v270 = vpop.f32.mrf.mxu0
    %v271 = vadd.f32 0.0, %v270
    %272 = vdwg.mxu0
    %273 = vmatprep.subr.mxu0 %v137
    %274 = vmatpush1.msra.mxu0 %v136
    %275 = vmatprep.subr.mxu0 %v133
    %276 = vmatpush1.msra.mxu0 %v132
    %277 = vmatprep.subr.mxu0 %v129
    %278 = vmatpush1.msra.mxu0 %v128
    %279 = vmatprep.subr.mxu0 %v125
    %280 = vmatpush1.msra.mxu0 %v124
    %281 = vmatprep.subr.mxu0 %v121
    %282 = vmatpush1.msra.mxu0 %v120
    %283 = vmatprep.subr.mxu0 %v117
    %284 = vmatpush1.msra.mxu0 %v116
    %285 = vmatprep.subr.mxu0 %v113
    %286 = vmatpush1.msra.mxu0 %v112
    %287 = vmatprep.subr.mxu0 %v109
    %288 = vmatpush1.msra.mxu0 %v108
    %289 = vmatprep.subr.mxu0 %v105
    %290 = vmatpush1.msra.mxu0 %v104
    %291 = vmatprep.subr.mxu0 %v101
    %292 = vmatpush1.msra.mxu0 %v100
    %293 = vmatprep.subr.mxu0 %v97
    %294 = vmatpush1.msra.mxu0 %v96
    %295 = vmatprep.subr.mxu0 %v93
    %296 = vmatpush1.msra.mxu0 %v92
    %297 = vmatprep.subr.mxu0 %v89
    %298 = vmatpush1.msra.mxu0 %v88
    %299 = vmatprep.subr.mxu0 %v85
    %300 = vmatpush1.msra.mxu0 %v84
    %301 = vmatprep.subr.mxu0 %v81
    %302 = vmatpush1.msra.mxu0 %v80
    %303 = vmatprep.subr.mxu0 %v77
    %304 = vmatpush1.msra.mxu0 %v76
    %305 = vmatprep.subr.mxu0 %v201
    %306 = vmatpush2.msra.mxu0 %v200
    %307 = vmatprep.subr.mxu0 %v197
    %308 = vmatpush2.msra.mxu0 %v196
    %309 = vmatprep.subr.mxu0 %v193
    %310 = vmatpush2.msra.mxu0 %v192
    %311 = vmatprep.subr.mxu0 %v189
    %312 = vmatpush2.msra.mxu0 %v188
    %313 = vmatprep.subr.mxu0 %v185
    %314 = vmatpush2.msra.mxu0 %v184
    %315 = vmatprep.subr.mxu0 %v181
    %316 = vmatpush2.msra.mxu0 %v180
    %317 = vmatprep.subr.mxu0 %v177
    %318 = vmatpush2.msra.mxu0 %v176
    %319 = vmatprep.subr.mxu0 %v173
    %320 = vmatpush2.msra.mxu0 %v172
    %321 = vmatprep.subr.mxu0 %v169
    %322 = vmatpush2.msra.mxu0 %v168
    %323 = vmatprep.subr.mxu0 %v165
    %324 = vmatpush2.msra.mxu0 %v164
    %325 = vmatprep.subr.mxu0 %v161
    %326 = vmatpush2.msra.mxu0 %v160
    %327 = vmatprep.subr.mxu0 %v157
    %328 = vmatpush2.msra.mxu0 %v156
    %329 = vmatprep.subr.mxu0 %v153
    %330 = vmatpush2.msra.mxu0 %v152
    %331 = vmatprep.subr.mxu0 %v149
    %332 = vmatpush2.msra.mxu0 %v148
    %333 = vmatprep.subr.mxu0 %v145
    %334 = vmatpush2.msra.mxu0 %v144
    %335 = vmatprep.subr.mxu0 %v141
    %336 = vmatpush2.msra.mxu0 %v140
    %337 = vmatprep.mubr.f32.mxu0 %v73
    %338 = vmatmul.mubr.f32.gmra.mxu0 %v72
    %v339 = vpop.f32.mrf.mxu0
    %v340 = vadd.f32 0.0, %v339
    %v341 = vpop.f32.mrf.mxu0
    %v342 = vadd.f32 0.0, %v341
    %343 = vdwg.mxu0
    %p344 = scmp.eq.s32.totalorder 0, 0
    // Predicated region
    $region38: #{tpu_custom_call.1} parent=1 // pred_check
      %p345 = pneg %p344
    $region39: #{tpu_custom_call.1} parent=1 // pred_check_branch
      %347 = sbr.rel (%p345) target = $region41
    $region40: #{tpu_custom_call.1} parent=1 // pred_region
      %348 = vst [vmem:[#allocation2] sm:$0xff] %v269
      %349 = vst [vmem:[#allocation2 + $0x8] sm:$0xff] %v271
      %350 = vst [vmem:[#allocation2 + $0x10] sm:$0xff] %v340
      %351 = vst [vmem:[#allocation2 + $0x18] sm:$0xff] %v342
    $region41: #{tpu_custom_call.1} parent=1 // pred_fallthru
      _
    %p352 = scmp.gt.s32.totalorder 0, 0
    // Predicated region
    $region42: #{tpu_custom_call.1} parent=1 // pred_check
      %p353 = pneg %p352
    $region43: #{tpu_custom_call.1} parent=1 // pred_check_branch
      %355 = sbr.rel (%p353) target = $region45
    $region44: #{tpu_custom_call.1} parent=1 // pred_region
      %v356 = vld [vmem:[#allocation2] sm:$0xff]
      %v357 = vld [vmem:[#allocation2 + $0x8] sm:$0xff]
      %v358 = vld [vmem:[#allocation2 + $0x10] sm:$0xff]
      %v359 = vld [vmem:[#allocation2 + $0x18] sm:$0xff]
      %v360 = vadd.f32 %v356, %v269
      %v361 = vadd.f32 %v357, %v271
      %v362 = vadd.f32 %v358, %v340
      %v363 = vadd.f32 %v359, %v342
      %364 = vst [vmem:[#allocation2] sm:$0xff] %v360
      %365 = vst [vmem:[#allocation2 + $0x8] sm:$0xff] %v361
      %366 = vst [vmem:[#allocation2 + $0x10] sm:$0xff] %v362
      %367 = vst [vmem:[#allocation2 + $0x18] sm:$0xff] %v363
    $region45: #{tpu_custom_call.1} parent=1 // pred_fallthru
      _
    // Predicated region
    $region46: #{tpu_custom_call.1} parent=1 // pred_check
      %p368 = pneg %p344
    $region47: #{tpu_custom_call.1} parent=1 // pred_check_branch
      %370 = sbr.rel (%p368) target = $region49
    $region48: #{tpu_custom_call.1} parent=1 // pred_region
      %v371 = vld [vmem:[#allocation2] sm:$0xff]
      %v372 = vld [vmem:[#allocation2 + $0x8] sm:$0xff]
      %v373 = vld [vmem:[#allocation2 + $0x10] sm:$0xff]
      %v374 = vld [vmem:[#allocation2 + $0x18] sm:$0xff]
      %v375 = vld [vmem:[#allocation8] sm:$0xf]
      %v377 = vlaneseq
      %v378 = vshrl.u32 %v377, 7
      %v379 = vsub.s32 0, %v378
      %v380 = vrot.slane %v375, %v379
      %v381 = vlaneseq
      %v382 = vshrl.u32 %v381, 7
      %v383 = vsub.s32 1, %v382
      %v384 = vrot.slane %v375, %v383
      %v385 = vlaneseq
      %v386 = vshrl.u32 %v385, 7
      %v387 = vsub.s32 2, %v386
      %v388 = vrot.slane %v375, %v387
      %v389 = vlaneseq
      %v390 = vshrl.u32 %v389, 7
      %v391 = vsub.s32 3, %v390
      %v392 = vrot.slane %v375, %v391
      %v397 = vadd.f32 %v371, %v380
      %v398 = vadd.f32 %v372, %v384
      %v399 = vadd.f32 %v373, %v388
      %v400 = vadd.f32 %v374, %v392
      %v401 = vmax.f32 %v397, 0.0
      %v402 = vmax.f32 %v398, 0.0
      %v403 = vmax.f32 %v399, 0.0
      %v404 = vmax.f32 %v400, 0.0
      %v405 = vld [vmem:[#allocation9] sm:$0xff]
      %v406 = vld [vmem:[#allocation9 + $0x8] sm:$0xff]
      %v407 = vld [vmem:[#allocation9 + $0x10] sm:$0xff]
      %v408 = vld [vmem:[#allocation9 + $0x18] sm:$0xff]
      %v409 = vld [vmem:[#allocation9 + $0x20] sm:$0xff]
      %v410 = vld [vmem:[#allocation9 + $0x28] sm:$0xff]
      %v411 = vld [vmem:[#allocation9 + $0x30] sm:$0xff]
      %v412 = vld [vmem:[#allocation9 + $0x38] sm:$0xff]
      %v413 = vld [vmem:[#allocation9 + $0x40] sm:$0xff]
      %v414 = vld [vmem:[#allocation9 + $0x48] sm:$0xff]
      %v415 = vld [vmem:[#allocation9 + $0x50] sm:$0xff]
      %v416 = vld [vmem:[#allocation9 + $0x58] sm:$0xff]
      %v417 = vld [vmem:[#allocation9 + $0x60] sm:$0xff]
      %v418 = vld [vmem:[#allocation9 + $0x68] sm:$0xff]
      %v419 = vld [vmem:[#allocation9 + $0x70] sm:$0xff]
      %v420 = vld [vmem:[#allocation9 + $0x78] sm:$0xff]
      %v421 = vld [vmem:[#allocation9 + $0x80] sm:$0xff]
      %v422 = vld [vmem:[#allocation9 + $0x88] sm:$0xff]
      %v423 = vld [vmem:[#allocation9 + $0x90] sm:$0xff]
      %v424 = vld [vmem:[#allocation9 + $0x98] sm:$0xff]
      %v425 = vld [vmem:[#allocation9 + $0xa0] sm:$0xff]
      %v426 = vld [vmem:[#allocation9 + $0xa8] sm:$0xff]
      %v427 = vld [vmem:[#allocation9 + $0xb0] sm:$0xff]
      %v428 = vld [vmem:[#allocation9 + $0xb8] sm:$0xff]
      %v429 = vld [vmem:[#allocation9 + $0xc0] sm:$0xff]
      %v430 = vld [vmem:[#allocation9 + $0xc8] sm:$0xff]
      %v431 = vld [vmem:[#allocation9 + $0xd0] sm:$0xff]
      %v432 = vld [vmem:[#allocation9 + $0xd8] sm:$0xff]
      %v433 = vld [vmem:[#allocation9 + $0xe0] sm:$0xff]
      %v434 = vld [vmem:[#allocation9 + $0xe8] sm:$0xff]
      %v435 = vld [vmem:[#allocation9 + $0xf0] sm:$0xff]
      %v436 = vld [vmem:[#allocation9 + $0xf8] sm:$0xff]
      %v437 = vld [vmem:[#allocation9 + $0x100] sm:$0xff]
      %v438 = vld [vmem:[#allocation9 + $0x108] sm:$0xff]
      %v439 = vld [vmem:[#allocation9 + $0x110] sm:$0xff]
      %v440 = vld [vmem:[#allocation9 + $0x118] sm:$0xff]
      %v441 = vld [vmem:[#allocation9 + $0x120] sm:$0xff]
      %v442 = vld [vmem:[#allocation9 + $0x128] sm:$0xff]
      %v443 = vld [vmem:[#allocation9 + $0x130] sm:$0xff]
      %v444 = vld [vmem:[#allocation9 + $0x138] sm:$0xff]
      %v445 = vld [vmem:[#allocation9 + $0x140] sm:$0xff]
      %v446 = vld [vmem:[#allocation9 + $0x148] sm:$0xff]
      %v447 = vld [vmem:[#allocation9 + $0x150] sm:$0xff]
      %v448 = vld [vmem:[#allocation9 + $0x158] sm:$0xff]
      %v449 = vld [vmem:[#allocation9 + $0x160] sm:$0xff]
      %v450 = vld [vmem:[#allocation9 + $0x168] sm:$0xff]
      %v451 = vld [vmem:[#allocation9 + $0x170] sm:$0xff]
      %v452 = vld [vmem:[#allocation9 + $0x178] sm:$0xff]
      %v453 = vld [vmem:[#allocation9 + $0x180] sm:$0xff]
      %v454 = vld [vmem:[#allocation9 + $0x188] sm:$0xff]
      %v455 = vld [vmem:[#allocation9 + $0x190] sm:$0xff]
      %v456 = vld [vmem:[#allocation9 + $0x198] sm:$0xff]
      %v457 = vld [vmem:[#allocation9 + $0x1a0] sm:$0xff]
      %v458 = vld [vmem:[#allocation9 + $0x1a8] sm:$0xff]
      %v459 = vld [vmem:[#allocation9 + $0x1b0] sm:$0xff]
      %v460 = vld [vmem:[#allocation9 + $0x1b8] sm:$0xff]
      %v461 = vld [vmem:[#allocation9 + $0x1c0] sm:$0xff]
      %v462 = vld [vmem:[#allocation9 + $0x1c8] sm:$0xff]
      %v463 = vld [vmem:[#allocation9 + $0x1d0] sm:$0xff]
      %v464 = vld [vmem:[#allocation9 + $0x1d8] sm:$0xff]
      %v465 = vld [vmem:[#allocation9 + $0x1e0] sm:$0xff]
      %v466 = vld [vmem:[#allocation9 + $0x1e8] sm:$0xff]
      %v467 = vld [vmem:[#allocation9 + $0x1f0] sm:$0xff]
      %v468 = vld [vmem:[#allocation9 + $0x1f8] sm:$0xff]
      %v469 = vld [vmem:[%s4] sm:$0x1]
      %v471 = vlaneseq
      %v472 = vshrl.u32 %v471, 7
      %v473 = vsub.s32 0, %v472
      %v474 = vrot.slane %v469, %v473
      %476 = vmatprep.subr.mxu0 0.0
      %477 = vmatpush1.msra.mxu0 %v420
      %478 = vmatprep.subr.mxu0 0.0
      %479 = vmatpush1.msra.mxu0 %v419
      %480 = vmatprep.subr.mxu0 0.0
      %481 = vmatpush1.msra.mxu0 %v418
      %482 = vmatprep.subr.mxu0 0.0
      %483 = vmatpush1.msra.mxu0 %v417
      %484 = vmatprep.subr.mxu0 0.0
      %485 = vmatpush1.msra.mxu0 %v416
      %486 = vmatprep.subr.mxu0 0.0
      %487 = vmatpush1.msra.mxu0 %v415
      %488 = vmatprep.subr.mxu0 0.0
      %489 = vmatpush1.msra.mxu0 %v414
      %490 = vmatprep.subr.mxu0 0.0
      %491 = vmatpush1.msra.mxu0 %v413
      %492 = vmatprep.subr.mxu0 0.0
      %493 = vmatpush1.msra.mxu0 %v412
      %494 = vmatprep.subr.mxu0 0.0
      %495 = vmatpush1.msra.mxu0 %v411
      %496 = vmatprep.subr.mxu0 0.0
      %497 = vmatpush1.msra.mxu0 %v410
      %498 = vmatprep.subr.mxu0 0.0
      %499 = vmatpush1.msra.mxu0 %v409
      %500 = vmatprep.subr.mxu0 0.0
      %501 = vmatpush1.msra.mxu0 %v408
      %502 = vmatprep.subr.mxu0 0.0
      %503 = vmatpush1.msra.mxu0 %v407
      %504 = vmatprep.subr.mxu0 0.0
      %505 = vmatpush1.msra.mxu0 %v406
      %506 = vmatprep.subr.mxu0 0.0
      %507 = vmatpush1.msra.mxu0 %v405
      %508 = vmatprep.subr.mxu0 0.0
      %509 = vmatpush2.msra.mxu0 %v436
      %510 = vmatprep.subr.mxu0 0.0
      %511 = vmatpush2.msra.mxu0 %v435
      %512 = vmatprep.subr.mxu0 0.0
      %513 = vmatpush2.msra.mxu0 %v434
      %514 = vmatprep.subr.mxu0 0.0
      %515 = vmatpush2.msra.mxu0 %v433
      %516 = vmatprep.subr.mxu0 0.0
      %517 = vmatpush2.msra.mxu0 %v432
      %518 = vmatprep.subr.mxu0 0.0
      %519 = vmatpush2.msra.mxu0 %v431
      %520 = vmatprep.subr.mxu0 0.0
      %521 = vmatpush2.msra.mxu0 %v430
      %522 = vmatprep.subr.mxu0 0.0
      %523 = vmatpush2.msra.mxu0 %v429
      %524 = vmatprep.subr.mxu0 0.0
      %525 = vmatpush2.msra.mxu0 %v428
      %526 = vmatprep.subr.mxu0 0.0
      %527 = vmatpush2.msra.mxu0 %v427
      %528 = vmatprep.subr.mxu0 0.0
      %529 = vmatpush2.msra.mxu0 %v426
      %530 = vmatprep.subr.mxu0 0.0
      %531 = vmatpush2.msra.mxu0 %v425
      %532 = vmatprep.subr.mxu0 0.0
      %533 = vmatpush2.msra.mxu0 %v424
      %534 = vmatprep.subr.mxu0 0.0
      %535 = vmatpush2.msra.mxu0 %v423
      %536 = vmatprep.subr.mxu0 0.0
      %537 = vmatpush2.msra.mxu0 %v422
      %538 = vmatprep.subr.mxu0 0.0
      %539 = vmatpush2.msra.mxu0 %v421
      %540 = vmatprep.mubr.f32.mxu0 %v402
      %541 = vmatmul.mubr.f32.gmra.mxu0 %v401
      %v542 = vpop.f32.mrf.mxu0
      %v543 = vadd.f32 %v474, %v542
      %v544 = vpop.f32.mrf.mxu0
      %545 = vdwg.mxu0
      %546 = vmatprep.subr.mxu0 0.0
      %547 = vmatpush1.msra.mxu0 %v452
      %548 = vmatprep.subr.mxu0 0.0
      %549 = vmatpush1.msra.mxu0 %v451
      %550 = vmatprep.subr.mxu0 0.0
      %551 = vmatpush1.msra.mxu0 %v450
      %552 = vmatprep.subr.mxu0 0.0
      %553 = vmatpush1.msra.mxu0 %v449
      %554 = vmatprep.subr.mxu0 0.0
      %555 = vmatpush1.msra.mxu0 %v448
      %556 = vmatprep.subr.mxu0 0.0
      %557 = vmatpush1.msra.mxu0 %v447
      %558 = vmatprep.subr.mxu0 0.0
      %559 = vmatpush1.msra.mxu0 %v446
      %560 = vmatprep.subr.mxu0 0.0
      %561 = vmatpush1.msra.mxu0 %v445
      %562 = vmatprep.subr.mxu0 0.0
      %563 = vmatpush1.msra.mxu0 %v444
      %564 = vmatprep.subr.mxu0 0.0
      %565 = vmatpush1.msra.mxu0 %v443
      %566 = vmatprep.subr.mxu0 0.0
      %567 = vmatpush1.msra.mxu0 %v442
      %568 = vmatprep.subr.mxu0 0.0
      %569 = vmatpush1.msra.mxu0 %v441
      %570 = vmatprep.subr.mxu0 0.0
      %571 = vmatpush1.msra.mxu0 %v440
      %572 = vmatprep.subr.mxu0 0.0
      %573 = vmatpush1.msra.mxu0 %v439
      %574 = vmatprep.subr.mxu0 0.0
      %575 = vmatpush1.msra.mxu0 %v438
      %576 = vmatprep.subr.mxu0 0.0
      %577 = vmatpush1.msra.mxu0 %v437
      %578 = vmatprep.subr.mxu0 0.0
      %579 = vmatpush2.msra.mxu0 %v468
      %580 = vmatprep.subr.mxu0 0.0
      %581 = vmatpush2.msra.mxu0 %v467
      %582 = vmatprep.subr.mxu0 0.0
      %583 = vmatpush2.msra.mxu0 %v466
      %584 = vmatprep.subr.mxu0 0.0
      %585 = vmatpush2.msra.mxu0 %v465
      %586 = vmatprep.subr.mxu0 0.0
      %587 = vmatpush2.msra.mxu0 %v464
      %588 = vmatprep.subr.mxu0 0.0
      %589 = vmatpush2.msra.mxu0 %v463
      %590 = vmatprep.subr.mxu0 0.0
      %591 = vmatpush2.msra.mxu0 %v462
      %592 = vmatprep.subr.mxu0 0.0
      %593 = vmatpush2.msra.mxu0 %v461
      %594 = vmatprep.subr.mxu0 0.0
      %595 = vmatpush2.msra.mxu0 %v460
      %596 = vmatprep.subr.mxu0 0.0
      %597 = vmatpush2.msra.mxu0 %v459
      %598 = vmatprep.subr.mxu0 0.0
      %599 = vmatpush2.msra.mxu0 %v458
      %600 = vmatprep.subr.mxu0 0.0
      %601 = vmatpush2.msra.mxu0 %v457
      %602 = vmatprep.subr.mxu0 0.0
      %603 = vmatpush2.msra.mxu0 %v456
      %604 = vmatprep.subr.mxu0 0.0
      %605 = vmatpush2.msra.mxu0 %v455
      %606 = vmatprep.subr.mxu0 0.0
      %607 = vmatpush2.msra.mxu0 %v454
      %608 = vmatprep.subr.mxu0 0.0
      %609 = vmatpush2.msra.mxu0 %v453
      %610 = vmatprep.mubr.f32.mxu0 %v404
      %611 = vmatmul.mubr.f32.gmra.mxu0 %v403
      %v612 = vpop.f32.mrf.mxu0
      %v613 = vadd.f32 %v543, %v612
      %v614 = vpop.f32.mrf.mxu0
      %615 = vdwg.mxu0
      %616 = vst [vmem:[#allocation11] sm:$0xff] %v613
    $region49: #{tpu_custom_call.1} parent=1 // pred_fallthru
      _
    // Predicated region
    $region50: #{tpu_custom_call.1} parent=1 // pred_check
      _
    $region51: #{tpu_custom_call.1} parent=1 // pred_check_branch
      %618 = sbr.rel (0) target = $region53
    $region52: #{tpu_custom_call.1} parent=1 // pred_region
      %s620 = ssub.s32 128, 128
      %621 = vsyncadd [#allocation5], %s620
      %s623 = sshll.u32 [#allocation11], 4
      %s624 = int_to_ptr.vmem [resolvable:$true] %s623
      %626 = dma.vmem_to_hbm [thread:$0]  %s624, 128, %s5, [#allocation5]
    $region53: #{tpu_custom_call.1} parent=1 // pred_fallthru
      _
    // Predicated region
    $region54: #{tpu_custom_call.1} parent=1 // pred_check
      _
    $region55: #{tpu_custom_call.1} parent=1 // pred_check_branch
      %628 = sbr.rel (0) target = $region57
    $region56: #{tpu_custom_call.1} parent=1 // pred_region
      %629 = dma.done [#allocation5], 128
    $region57: #{tpu_custom_call.1} parent=1 // pred_fallthru
      _
    %630 = vsyncpa [#allocation4], 1
    %631 = vsyncpa [#allocation7], 1
    %632 = vsyncpa [#allocation10], 1
    %633 = vsyncpa [#allocation5], 1

</llo_original>
